<compile_context>
chip_gen: v7x
topology: tpu7x:2x2x1
jax: 0.10.0
libtpu: 0.0.40
codegen_flags: <defaults>
</compile_context>

<pallas_src>
import math

import jax
import jax.numpy as jnp
from jax import lax
from jax.experimental import pallas as pl
from jax.experimental.pallas import tpu as pltpu

# ----- small config consistent with LlamaAttention -----
HIDDEN = 32
NUM_HEADS = 4
NUM_KV_HEADS = 2
HEAD_DIM = HIDDEN // NUM_HEADS              # 8
NUM_KV_GROUPS = NUM_HEADS // NUM_KV_HEADS   # 2
ROPE_THETA = 10000.0
BATCH = 2
SEQ = 8


# ---------------------------------------------------------------------------
# Kernel 1: fused QKV projection + RoPE, head-major outputs
# ---------------------------------------------------------------------------
def _qkv_rope_proj_kernel(x_ref, w_ref, cos_ref, sin_ref, q_ref, k_ref, v_ref):
    # x_ref   : (1, S, hidden)          native dtype
    # w_ref   : (hidden, (H+2*Hkv)*D)   native dtype, q-columns pre-scaled by 1/sqrt(D)
    # cos_ref : (1, S, D) fp32
    # sin_ref : (1, S, D) fp32, sign-folded ([-sin, sin]) so the kernel only needs a rotation
    # q_ref   : (1, H,   S, D)
    # k_ref   : (1, Hkv, S, D)
    # v_ref   : (1, Hkv, S, D)
    _, H, S, D = q_ref.shape
    Hkv = k_ref.shape[1]
    half = D // 2

    # One MXU matmul produces q, k and v together; operands stay in their native dtype,
    # accumulation is fp32.
    qkv = jnp.dot(x_ref[0], w_ref[...], preferred_element_type=jnp.float32)  # (S, (H+2Hkv)*D)

    cos = cos_ref[0]   # (S, D)
    sin = sin_ref[0]   # (S, D), sign-folded

    def rope(t):  # t: (S, D) fp32
        # rotate_half(t) * sin  ==  rotate(t, D/2) * sign_folded_sin
        # TODO(synk): at head_dim=128 use pltpu.roll(t, shift=half, axis=-1) (free XLU slot)
        # instead of slice+concat; with only D=8 lanes the concat form is the safe lowering.
        rot = jnp.concatenate([t[:, half:], t[:, :half]], axis=-1)
        return t * cos + rot * sin

    for h in range(H):                                   # query heads (RoPE applied)
        q_ref[0, h] = rope(qkv[:, h * D:(h + 1) * D]).astype(q_ref.dtype)
    for h in range(Hkv):                                 # kv heads
        k_col = (H + h) * D
        v_col = (H + Hkv + h) * D
        k_ref[0, h] = rope(qkv[:, k_col:k_col + D]).astype(k_ref.dtype)
        v_ref[0, h] = qkv[:, v_col:v_col + D].astype(v_ref.dtype)


def qkv_rope_proj(hidden_states, w_qkv, cos, sin_rot, *, num_heads, num_kv_heads, head_dim):
    B, S, hidden = hidden_states.shape
    dtype = hidden_states.dtype
    out_shape = (
        jax.ShapeDtypeStruct((B, num_heads, S, head_dim), dtype),
        jax.ShapeDtypeStruct((B, num_kv_heads, S, head_dim), dtype),
        jax.ShapeDtypeStruct((B, num_kv_heads, S, head_dim), dtype),
    )
    return pl.pallas_call(
        _qkv_rope_proj_kernel,
        out_shape=out_shape,
        grid=(B,),   # TODO(synk): tile S as well for long sequences / large hidden sizes.
        in_specs=[
            pl.BlockSpec((1, S, hidden), lambda b: (b, 0, 0)),
            pl.BlockSpec((hidden, w_qkv.shape[1]), lambda b: (0, 0)),
            pl.BlockSpec((1, S, head_dim), lambda b: (b, 0, 0)),
            pl.BlockSpec((1, S, head_dim), lambda b: (b, 0, 0)),
        ],
        out_specs=(
            pl.BlockSpec((1, num_heads, S, head_dim), lambda b: (b, 0, 0, 0)),
            pl.BlockSpec((1, num_kv_heads, S, head_dim), lambda b: (b, 0, 0, 0)),
            pl.BlockSpec((1, num_kv_heads, S, head_dim), lambda b: (b, 0, 0, 0)),
        ),
        compiler_params=pltpu.CompilerParams(dimension_semantics=("parallel",)),
    )(hidden_states, w_qkv, cos, sin_rot)


# ---------------------------------------------------------------------------
# Kernel 2: tiled causal flash attention (online softmax) with fused o_proj epilogue
# ---------------------------------------------------------------------------
def _flash_attn_oproj_kernel(q_ref, k_ref, v_ref, wo_ref, o_ref, m_ref, l_ref, acc_ref):
    # q_ref  : (1, H,   q_tile, D)   native dtype (1/sqrt(D) already folded into Wq)
    # k_ref  : (1, Hkv, kv_tile, D)
    # v_ref  : (1, Hkv, kv_tile, D)
    # wo_ref : (H*D, hidden)
    # o_ref  : (1, q_tile, hidden)   final module-output block (lane-dense slab)
    # m/l    : (H, q_tile, 1) fp32 online-softmax stats,  acc: (H, q_tile, D) fp32 numerator
    _, H, q_tile, D = q_ref.shape
    Hkv, kv_tile = k_ref.shape[1], k_ref.shape[2]
    G = H // Hkv
    hidden = wo_ref.shape[1]

    qi = pl.program_id(1)
    ki = pl.program_id(2)

    @pl.when(ki == 0)
    def _init():
        m_ref[...] = jnp.full(m_ref.shape, -jnp.inf, jnp.float32)
        l_ref[...] = jnp.zeros(l_ref.shape, jnp.float32)
        acc_ref[...] = jnp.zeros(acc_ref.shape, jnp.float32)

    # Causal block skipping: kv blocks strictly in the future of this q block do no work.
    @pl.when(ki * kv_tile <= qi * q_tile + (q_tile - 1))
    def _compute():
        q_pos = qi * q_tile + lax.broadcasted_iota(jnp.int32, (q_tile, kv_tile), 0)
        k_pos = ki * kv_tile + lax.broadcasted_iota(jnp.int32, (q_tile, kv_tile), 1)
        causal = k_pos <= q_pos

        # All heads of this (batch, q-block) are handled in one grid step (static unroll of a
        # tiny head count) so grid/pipeline overhead is amortized.  At real model sizes
        # (head_dim=128) batch the heads with a 3-D einsum instead; at head_dim=8 the MXU
        # work is identical either way.
        for h in range(H):
            q_h = q_ref[0, h]              # (q_tile, D)   native dtype
            k_h = k_ref[0, h // G]         # (kv_tile, D)  GQA: shared kv head, no repeat_kv
            v_h = v_ref[0, h // G]
            # QK^T without materializing k.T: contract the last dims directly on the MXU.
            s = lax.dot_general(q_h, k_h, (((1,), (1,)), ((), ())),
                                preferred_element_type=jnp.float32)  # (q_tile, kv_tile) fp32
            s = jnp.where(causal, s, -1e30)

            m_prev = m_ref[h]                                        # (q_tile, 1)
            m_new = jnp.maximum(m_prev, jnp.max(s, axis=-1, keepdims=True))
            alpha = jnp.exp(m_prev - m_new)
            p = jnp.exp(s - m_new)                                   # fp32 softmax numerator
            l_ref[h] = alpha * l_ref[h] + jnp.sum(p, axis=-1, keepdims=True)
            acc_ref[h] = alpha * acc_ref[h] + jnp.dot(
                p.astype(v_h.dtype), v_h, preferred_element_type=jnp.float32)
            m_ref[h] = m_new

    # Finalize: normalize and fold o_proj into the epilogue so the per-head attention output
    # never round-trips through HBM; the store is a full-width (q_tile, hidden) slab.
    @pl.when(ki == pl.num_programs(2) - 1)
    def _finalize():
        out = jnp.zeros((q_tile, hidden), jnp.float32)
        for h in range(H):
            attn_h = acc_ref[h] * pl.reciprocal(l_ref[h], approx=True)   # (q_tile, D) fp32
            out = out + jnp.dot(attn_h.astype(wo_ref.dtype),
                                wo_ref[h * D:(h + 1) * D, :],
                                preferred_element_type=jnp.float32)
        o_ref[0] = out.astype(o_ref.dtype)


def flash_attention_oproj(q, k, v, w_o, *, q_tile=None, kv_tile=None):
    """q: (B,H,S,D), k/v: (B,Hkv,S,D), w_o: (H*D, hidden) -> (B, S, hidden)."""
    B, H, S, D = q.shape
    Hkv = k.shape[1]
    hidden = w_o.shape[1]
    # TODO(synk): for real sequence lengths size q_tile/kv_tile against the generation's
    # scoped-VMEM budget (~32 MiB on v7x vs 128 MiB physical on v5e/v6e) and set
    # vmem_limit_bytes explicitly.
    q_tile = q_tile or min(S, 128)
    kv_tile = kv_tile or min(S, 128)
    assert S % q_tile == 0 and S % kv_tile == 0
    grid = (B, S // q_tile, S // kv_tile)

    itemsize = q.dtype.itemsize
    cost = pl.CostEstimate(
        flops=4 * B * H * S * S * D + 2 * B * S * H * D * hidden,
        transcendentals=B * H * S * S,
        bytes_accessed=(q.size + k.size + v.size + w_o.size + B * S * hidden) * itemsize,
    )

    return pl.pallas_call(
        _flash_attn_oproj_kernel,
        out_shape=jax.ShapeDtypeStruct((B, S, hidden), q.dtype),
        grid=grid,
        in_specs=[
            pl.BlockSpec((1, H, q_tile, D), lambda b, qi, ki: (b, 0, qi, 0)),
            pl.BlockSpec((1, Hkv, kv_tile, D), lambda b, qi, ki: (b, 0, ki, 0)),
            pl.BlockSpec((1, Hkv, kv_tile, D), lambda b, qi, ki: (b, 0, ki, 0)),
            pl.BlockSpec((H * D, hidden), lambda b, qi, ki: (0, 0)),
        ],
        out_specs=pl.BlockSpec((1, q_tile, hidden), lambda b, qi, ki: (b, qi, 0)),
        scratch_shapes=[
            pltpu.VMEM((H, q_tile, 1), jnp.float32),   # m (running max)
            pltpu.VMEM((H, q_tile, 1), jnp.float32),   # l (running denom)
            pltpu.VMEM((H, q_tile, D), jnp.float32),   # acc (running numerator)
        ],
        compiler_params=pltpu.CompilerParams(
            dimension_semantics=("parallel", "parallel", "arbitrary")),
        cost_estimate=cost,
    )(q, k, v, w_o)


# ---------------------------------------------------------------------------
# Wrapper glue: rotary tables + one-time weight prep
# ---------------------------------------------------------------------------
def rotary_tables(position_ids, dim, base):
    """cos table and sign-folded sin table, both (B, S, dim) fp32.

    rotate_half(x) * sin == rotate(x, dim/2) * sin_rot with sin_rot = [-sin(f), sin(f)],
    so the kernel only needs a pure rotation of each head vector.
    """
    inv_freq = 1.0 / (base ** (jnp.arange(0, dim, 2, dtype=jnp.float32) / dim))      # (dim/2,)
    freqs = position_ids.astype(jnp.float32)[:, :, None] * inv_freq[None, None, :]   # (B,S,dim/2)
    cos = jnp.cos(freqs)
    sin = jnp.sin(freqs)
    return (jnp.concatenate([cos, cos], axis=-1),
            jnp.concatenate([-sin, sin], axis=-1))


def llama_flash_attention2_forward(params, hidden_states, position_ids):
    """Equivalent of LlamaFlashAttention2.forward (no cache, eval mode -> dropout 0)."""
    dtype = hidden_states.dtype
    scale = 1.0 / math.sqrt(HEAD_DIM)

    # One-time weight prep (would happen at model-load time):
    #  * concatenate Wq/Wk/Wv so q/k/v come from a single MXU matmul over x,
    #  * fold the 1/sqrt(head_dim) score scale into the q columns (RoPE is linear, so the
    #    scale commutes), removing the SxS scaling pass from the attention kernel.
    w_qkv = jnp.concatenate(
        [params["q_proj"].T * scale, params["k_proj"].T, params["v_proj"].T], axis=1
    ).astype(dtype)
    w_o = params["o_proj"].T.astype(dtype)

    cos, sin_rot = rotary_tables(position_ids, HEAD_DIM, ROPE_THETA)

    q, k, v = qkv_rope_proj(hidden_states, w_qkv, cos, sin_rot,
                            num_heads=NUM_HEADS, num_kv_heads=NUM_KV_HEADS,
                            head_dim=HEAD_DIM)
    return flash_attention_oproj(q, k, v, w_o)


# ---------------------------------------------------------------------------
# Pure-JAX reference (eager attention path) for verification
# ---------------------------------------------------------------------------
def _ref_rotary(position_ids, dim, base, dtype):
    inv_freq = 1.0 / (base ** (jnp.arange(0, dim, 2, dtype=jnp.float32) / dim))
    freqs = position_ids.astype(jnp.float32)[:, :, None] * inv_freq[None, None, :]
    emb = jnp.concatenate([freqs, freqs], axis=-1)
    return jnp.cos(emb).astype(dtype), jnp.sin(emb).astype(dtype)


def _ref_rotate_half(x):
    d = x.shape[-1] // 2
    return jnp.concatenate([-x[..., d:], x[..., :d]], axis=-1)


def reference_forward(params, hidden_states, position_ids):
    B, S, _ = hidden_states.shape
    q = (hidden_states @ params["q_proj"].T).reshape(B, S, NUM_HEADS, HEAD_DIM).transpose(0, 2, 1, 3)
    k = (hidden_states @ params["k_proj"].T).reshape(B, S, NUM_KV_HEADS, HEAD_DIM).transpose(0, 2, 1, 3)
    v = (hidden_states @ params["v_proj"].T).reshape(B, S, NUM_KV_HEADS, HEAD_DIM).transpose(0, 2, 1, 3)
    cos, sin = _ref_rotary(position_ids, HEAD_DIM, ROPE_THETA, hidden_states.dtype)
    cos, sin = cos[:, None], sin[:, None]
    q = q * cos + _ref_rotate_half(q) * sin
    k = k * cos + _ref_rotate_half(k) * sin
    k = jnp.repeat(k, NUM_KV_GROUPS, axis=1)
    v = jnp.repeat(v, NUM_KV_GROUPS, axis=1)
    s = jnp.einsum("bhqd,bhkd->bhqk", q, k) / math.sqrt(HEAD_DIM)
    mask = jnp.tril(jnp.ones((S, S), dtype=bool))
    s = jnp.where(mask[None, None], s, -jnp.inf)
    p = jax.nn.softmax(s.astype(jnp.float32), axis=-1).astype(q.dtype)
    o = jnp.einsum("bhqk,bhkd->bhqd", p, v)
    o = o.transpose(0, 2, 1, 3).reshape(B, S, HIDDEN)
    return o @ params["o_proj"].T


# ---------------------------------------------------------------------------
if __name__ == "__main__":
    key = jax.random.PRNGKey(0)
    k0, k1, k2, k3, k4 = jax.random.split(key, 5)

    # PyTorch nn.Linear stores W as (out_features, in_features); attention_bias=False.
    params = {
        "q_proj": 0.02 * jax.random.normal(k0, (NUM_HEADS * HEAD_DIM, HIDDEN), jnp.float32),
        "k_proj": 0.02 * jax.random.normal(k1, (NUM_KV_HEADS * HEAD_DIM, HIDDEN), jnp.float32),
        "v_proj": 0.02 * jax.random.normal(k2, (NUM_KV_HEADS * HEAD_DIM, HIDDEN), jnp.float32),
        "o_proj": 0.02 * jax.random.normal(k3, (HIDDEN, HIDDEN), jnp.float32),
    }

    hidden_states = jax.random.normal(k4, (BATCH, SEQ, HIDDEN), jnp.float32)
    position_ids = jnp.broadcast_to(jnp.arange(SEQ, dtype=jnp.int32)[None, :], (BATCH, SEQ))

    out = jax.block_until_ready(
        llama_flash_attention2_forward(params, hidden_states, position_ids))
    ref = reference_forward(params, hidden_states, position_ids)

    assert out.shape == (BATCH, SEQ, HIDDEN)
    err = jnp.max(jnp.abs(out - ref))
    assert jnp.allclose(out, ref, atol=1e-3, rtol=1e-3), f"mismatch vs reference, max abs err {err:.3e}"
    print("KERNEL_OK")
</pallas_src>

<mosaic_0001>
module attributes {stable_mosaic.version = 11 : i64} {
  func.func @_qkv_rope_proj_kernel(%arg0: i32, %arg1: memref<1x8x32xf32, #tpu.memory_space<vmem>>, %arg2: memref<32x64xf32, #tpu.memory_space<vmem>>, %arg3: memref<1x8x8xf32, #tpu.memory_space<vmem>>, %arg4: memref<1x8x8xf32, #tpu.memory_space<vmem>>, %arg5: memref<1x4x8x8xf32, #tpu.memory_space<vmem>>, %arg6: memref<1x2x8x8xf32, #tpu.memory_space<vmem>>, %arg7: memref<1x2x8x8xf32, #tpu.memory_space<vmem>>) attributes {dimension_semantics = [#tpu.dimension_semantics<parallel>], iteration_bounds = array<i64: 2>, scalar_prefetch = 0 : i64, scratch_operands = 0 : i64, tpu.core_type = #tpu.core_type<tc>, window_params = [{transform_indices = @transform_0, window_bounds = array<i64: 1, 8, 32>}, {pipeline_mode = #tpu.pipeline_mode<synchronous>, transform_indices = @transform_1, window_bounds = array<i64: 32, 64>}, {transform_indices = @transform_2, window_bounds = array<i64: 1, 8, 8>}, {transform_indices = @transform_3, window_bounds = array<i64: 1, 8, 8>}, {transform_indices = @transform_4, window_bounds = array<i64: 1, 4, 8, 8>}, {transform_indices = @transform_5, window_bounds = array<i64: 1, 2, 8, 8>}, {transform_indices = @transform_6, window_bounds = array<i64: 1, 2, 8, 8>}]} {
    %c0 = arith.constant 0 : index
    %c0_0 = arith.constant 0 : index
    %c0_1 = arith.constant 0 : index
    %0 = vector.load %arg1[%c0, %c0_0, %c0_1] : memref<1x8x32xf32, #tpu.memory_space<vmem>>, vector<1x8x32xf32>
    %1 = vector.shape_cast %0 : vector<1x8x32xf32> to vector<8x32xf32>
    %c0_2 = arith.constant 0 : index
    %c0_3 = arith.constant 0 : index
    %2 = vector.load %arg2[%c0_2, %c0_3] : memref<32x64xf32, #tpu.memory_space<vmem>>, vector<32x64xf32>
    %cst = arith.constant dense<0.000000e+00> : vector<8x64xf32>
    %3 = tpu.matmul %1, %2, %cst {dimension_numbers = #tpu.dot_dimension_numbers<[1], [0], [0], [1], [0, 0, 1, 1], [], []>} : vector<8x32xf32>, vector<32x64xf32>, vector<8x64xf32> -> vector<8x64xf32>
    %c0_4 = arith.constant 0 : index
    %c0_5 = arith.constant 0 : index
    %c0_6 = arith.constant 0 : index
    %4 = vector.load %arg3[%c0_4, %c0_5, %c0_6] : memref<1x8x8xf32, #tpu.memory_space<vmem>>, vector<1x8x8xf32>
    %5 = vector.shape_cast %4 : vector<1x8x8xf32> to vector<8x8xf32>
    %c0_7 = arith.constant 0 : index
    %c0_8 = arith.constant 0 : index
    %c0_9 = arith.constant 0 : index
    %6 = vector.load %arg4[%c0_7, %c0_8, %c0_9] : memref<1x8x8xf32, #tpu.memory_space<vmem>>, vector<1x8x8xf32>
    %7 = vector.shape_cast %6 : vector<1x8x8xf32> to vector<8x8xf32>
    %8 = vector.extract_strided_slice %3 {offsets = [0, 0], sizes = [8, 8], strides = [1, 1]} : vector<8x64xf32> to vector<8x8xf32>
    %9 = vector.extract_strided_slice %8 {offsets = [0, 4], sizes = [8, 4], strides = [1, 1]} : vector<8x8xf32> to vector<8x4xf32>
    %10 = vector.extract_strided_slice %8 {offsets = [0, 0], sizes = [8, 4], strides = [1, 1]} : vector<8x8xf32> to vector<8x4xf32>
    %11 = tpu.concatenate %9, %10 in 1 : vector<8x4xf32>, vector<8x4xf32> -> vector<8x8xf32>
    %12 = arith.mulf %8, %5 : vector<8x8xf32>
    %13 = arith.mulf %11, %7 : vector<8x8xf32>
    %14 = arith.addf %12, %13 : vector<8x8xf32>
    %c0_10 = arith.constant 0 : index
    %c0_11 = arith.constant 0 : index
    %c0_12 = arith.constant 0 : index
    %c0_13 = arith.constant 0 : index
    %15 = vector.load %arg5[%c0_10, %c0_11, %c0_12, %c0_13] : memref<1x4x8x8xf32, #tpu.memory_space<vmem>>, vector<1x1x8x8xf32>
    %16 = vector.shape_cast %15 : vector<1x1x8x8xf32> to vector<8x8xf32>
    %17 = vector.shape_cast %14 : vector<8x8xf32> to vector<1x1x8x8xf32>
    tpu.vector_store %arg5[%c0_10, %c0_11, %c0_12, %c0_13], %17 {strides = array<i32>} : memref<1x4x8x8xf32, #tpu.memory_space<vmem>>, vector<1x1x8x8xf32>,
    %18 = vector.extract_strided_slice %3 {offsets = [0, 8], sizes = [8, 8], strides = [1, 1]} : vector<8x64xf32> to vector<8x8xf32>
    %19 = vector.extract_strided_slice %18 {offsets = [0, 4], sizes = [8, 4], strides = [1, 1]} : vector<8x8xf32> to vector<8x4xf32>
    %20 = vector.extract_strided_slice %18 {offsets = [0, 0], sizes = [8, 4], strides = [1, 1]} : vector<8x8xf32> to vector<8x4xf32>
    %21 = tpu.concatenate %19, %20 in 1 : vector<8x4xf32>, vector<8x4xf32> -> vector<8x8xf32>
    %22 = arith.mulf %18, %5 : vector<8x8xf32>
    %23 = arith.mulf %21, %7 : vector<8x8xf32>
    %24 = arith.addf %22, %23 : vector<8x8xf32>
    %c0_14 = arith.constant 0 : index
    %c1 = arith.constant 1 : index
    %c0_15 = arith.constant 0 : index
    %c0_16 = arith.constant 0 : index
    %25 = vector.load %arg5[%c0_14, %c1, %c0_15, %c0_16] : memref<1x4x8x8xf32, #tpu.memory_space<vmem>>, vector<1x1x8x8xf32>
    %26 = vector.shape_cast %25 : vector<1x1x8x8xf32> to vector<8x8xf32>
    %27 = vector.shape_cast %24 : vector<8x8xf32> to vector<1x1x8x8xf32>
    tpu.vector_store %arg5[%c0_14, %c1, %c0_15, %c0_16], %27 {strides = array<i32>} : memref<1x4x8x8xf32, #tpu.memory_space<vmem>>, vector<1x1x8x8xf32>,
    %28 = vector.extract_strided_slice %3 {offsets = [0, 16], sizes = [8, 8], strides = [1, 1]} : vector<8x64xf32> to vector<8x8xf32>
    %29 = vector.extract_strided_slice %28 {offsets = [0, 4], sizes = [8, 4], strides = [1, 1]} : vector<8x8xf32> to vector<8x4xf32>
    %30 = vector.extract_strided_slice %28 {offsets = [0, 0], sizes = [8, 4], strides = [1, 1]} : vector<8x8xf32> to vector<8x4xf32>
    %31 = tpu.concatenate %29, %30 in 1 : vector<8x4xf32>, vector<8x4xf32> -> vector<8x8xf32>
    %32 = arith.mulf %28, %5 : vector<8x8xf32>
    %33 = arith.mulf %31, %7 : vector<8x8xf32>
    %34 = arith.addf %32, %33 : vector<8x8xf32>
    %c0_17 = arith.constant 0 : index
    %c2 = arith.constant 2 : index
    %c0_18 = arith.constant 0 : index
    %c0_19 = arith.constant 0 : index
    %35 = vector.load %arg5[%c0_17, %c2, %c0_18, %c0_19] : memref<1x4x8x8xf32, #tpu.memory_space<vmem>>, vector<1x1x8x8xf32>
    %36 = vector.shape_cast %35 : vector<1x1x8x8xf32> to vector<8x8xf32>
    %37 = vector.shape_cast %34 : vector<8x8xf32> to vector<1x1x8x8xf32>
    tpu.vector_store %arg5[%c0_17, %c2, %c0_18, %c0_19], %37 {strides = array<i32>} : memref<1x4x8x8xf32, #tpu.memory_space<vmem>>, vector<1x1x8x8xf32>,
    %38 = vector.extract_strided_slice %3 {offsets = [0, 24], sizes = [8, 8], strides = [1, 1]} : vector<8x64xf32> to vector<8x8xf32>
    %39 = vector.extract_strided_slice %38 {offsets = [0, 4], sizes = [8, 4], strides = [1, 1]} : vector<8x8xf32> to vector<8x4xf32>
    %40 = vector.extract_strided_slice %38 {offsets = [0, 0], sizes = [8, 4], strides = [1, 1]} : vector<8x8xf32> to vector<8x4xf32>
    %41 = tpu.concatenate %39, %40 in 1 : vector<8x4xf32>, vector<8x4xf32> -> vector<8x8xf32>
    %42 = arith.mulf %38, %5 : vector<8x8xf32>
    %43 = arith.mulf %41, %7 : vector<8x8xf32>
    %44 = arith.addf %42, %43 : vector<8x8xf32>
    %c0_20 = arith.constant 0 : index
    %c3 = arith.constant 3 : index
    %c0_21 = arith.constant 0 : index
    %c0_22 = arith.constant 0 : index
    %45 = vector.load %arg5[%c0_20, %c3, %c0_21, %c0_22] : memref<1x4x8x8xf32, #tpu.memory_space<vmem>>, vector<1x1x8x8xf32>
    %46 = vector.shape_cast %45 : vector<1x1x8x8xf32> to vector<8x8xf32>
    %47 = vector.shape_cast %44 : vector<8x8xf32> to vector<1x1x8x8xf32>
    tpu.vector_store %arg5[%c0_20, %c3, %c0_21, %c0_22], %47 {strides = array<i32>} : memref<1x4x8x8xf32, #tpu.memory_space<vmem>>, vector<1x1x8x8xf32>,
    %48 = vector.extract_strided_slice %3 {offsets = [0, 32], sizes = [8, 8], strides = [1, 1]} : vector<8x64xf32> to vector<8x8xf32>
    %49 = vector.extract_strided_slice %48 {offsets = [0, 4], sizes = [8, 4], strides = [1, 1]} : vector<8x8xf32> to vector<8x4xf32>
    %50 = vector.extract_strided_slice %48 {offsets = [0, 0], sizes = [8, 4], strides = [1, 1]} : vector<8x8xf32> to vector<8x4xf32>
    %51 = tpu.concatenate %49, %50 in 1 : vector<8x4xf32>, vector<8x4xf32> -> vector<8x8xf32>
    %52 = arith.mulf %48, %5 : vector<8x8xf32>
    %53 = arith.mulf %51, %7 : vector<8x8xf32>
    %54 = arith.addf %52, %53 : vector<8x8xf32>
    %c0_23 = arith.constant 0 : index
    %c0_24 = arith.constant 0 : index
    %c0_25 = arith.constant 0 : index
    %c0_26 = arith.constant 0 : index
    %55 = vector.load %arg6[%c0_23, %c0_24, %c0_25, %c0_26] : memref<1x2x8x8xf32, #tpu.memory_space<vmem>>, vector<1x1x8x8xf32>
    %56 = vector.shape_cast %55 : vector<1x1x8x8xf32> to vector<8x8xf32>
    %57 = vector.shape_cast %54 : vector<8x8xf32> to vector<1x1x8x8xf32>
    tpu.vector_store %arg6[%c0_23, %c0_24, %c0_25, %c0_26], %57 {strides = array<i32>} : memref<1x2x8x8xf32, #tpu.memory_space<vmem>>, vector<1x1x8x8xf32>,
    %58 = vector.extract_strided_slice %3 {offsets = [0, 48], sizes = [8, 8], strides = [1, 1]} : vector<8x64xf32> to vector<8x8xf32>
    %c0_27 = arith.constant 0 : index
    %c0_28 = arith.constant 0 : index
    %c0_29 = arith.constant 0 : index
    %c0_30 = arith.constant 0 : index
    %59 = vector.load %arg7[%c0_27, %c0_28, %c0_29, %c0_30] : memref<1x2x8x8xf32, #tpu.memory_space<vmem>>, vector<1x1x8x8xf32>
    %60 = vector.shape_cast %59 : vector<1x1x8x8xf32> to vector<8x8xf32>
    %61 = vector.shape_cast %58 : vector<8x8xf32> to vector<1x1x8x8xf32>
    tpu.vector_store %arg7[%c0_27, %c0_28, %c0_29, %c0_30], %61 {strides = array<i32>} : memref<1x2x8x8xf32, #tpu.memory_space<vmem>>, vector<1x1x8x8xf32>,
    %62 = vector.extract_strided_slice %3 {offsets = [0, 40], sizes = [8, 8], strides = [1, 1]} : vector<8x64xf32> to vector<8x8xf32>
    %63 = vector.extract_strided_slice %62 {offsets = [0, 4], sizes = [8, 4], strides = [1, 1]} : vector<8x8xf32> to vector<8x4xf32>
    %64 = vector.extract_strided_slice %62 {offsets = [0, 0], sizes = [8, 4], strides = [1, 1]} : vector<8x8xf32> to vector<8x4xf32>
    %65 = tpu.concatenate %63, %64 in 1 : vector<8x4xf32>, vector<8x4xf32> -> vector<8x8xf32>
    %66 = arith.mulf %62, %5 : vector<8x8xf32>
    %67 = arith.mulf %65, %7 : vector<8x8xf32>
    %68 = arith.addf %66, %67 : vector<8x8xf32>
    %c0_31 = arith.constant 0 : index
    %c1_32 = arith.constant 1 : index
    %c0_33 = arith.constant 0 : index
    %c0_34 = arith.constant 0 : index
    %69 = vector.load %arg6[%c0_31, %c1_32, %c0_33, %c0_34] : memref<1x2x8x8xf32, #tpu.memory_space<vmem>>, vector<1x1x8x8xf32>
    %70 = vector.shape_cast %69 : vector<1x1x8x8xf32> to vector<8x8xf32>
    %71 = vector.shape_cast %68 : vector<8x8xf32> to vector<1x1x8x8xf32>
    tpu.vector_store %arg6[%c0_31, %c1_32, %c0_33, %c0_34], %71 {strides = array<i32>} : memref<1x2x8x8xf32, #tpu.memory_space<vmem>>, vector<1x1x8x8xf32>,
    %72 = vector.extract_strided_slice %3 {offsets = [0, 56], sizes = [8, 8], strides = [1, 1]} : vector<8x64xf32> to vector<8x8xf32>
    %c0_35 = arith.constant 0 : index
    %c1_36 = arith.constant 1 : index
    %c0_37 = arith.constant 0 : index
    %c0_38 = arith.constant 0 : index
    %73 = vector.load %arg7[%c0_35, %c1_36, %c0_37, %c0_38] : memref<1x2x8x8xf32, #tpu.memory_space<vmem>>, vector<1x1x8x8xf32>
    %74 = vector.shape_cast %73 : vector<1x1x8x8xf32> to vector<8x8xf32>
    %75 = vector.shape_cast %72 : vector<8x8xf32> to vector<1x1x8x8xf32>
    tpu.vector_store %arg7[%c0_35, %c1_36, %c0_37, %c0_38], %75 {strides = array<i32>} : memref<1x2x8x8xf32, #tpu.memory_space<vmem>>, vector<1x1x8x8xf32>,
    return
  }
  func.func @transform_0(%arg0: i32) -> (i32, i32, i32) {
    %c0_i32 = arith.constant 0 : i32
    %c0_i32_0 = arith.constant 0 : i32
    %c0_i32_1 = arith.constant 0 : i32
    return %arg0, %c0_i32, %c0_i32_0 : i32, i32, i32
  }
  func.func @transform_1(%arg0: i32) -> (i32, i32) {
    %c0_i32 = arith.constant 0 : i32
    %c0_i32_0 = arith.constant 0 : i32
    %c0_i32_1 = arith.constant 0 : i32
    return %c0_i32, %c0_i32_0 : i32, i32
  }
  func.func @transform_2(%arg0: i32) -> (i32, i32, i32) {
    %c0_i32 = arith.constant 0 : i32
    %c0_i32_0 = arith.constant 0 : i32
    %c0_i32_1 = arith.constant 0 : i32
    return %arg0, %c0_i32, %c0_i32_0 : i32, i32, i32
  }
  func.func @transform_3(%arg0: i32) -> (i32, i32, i32) {
    %c0_i32 = arith.constant 0 : i32
    %c0_i32_0 = arith.constant 0 : i32
    %c0_i32_1 = arith.constant 0 : i32
    return %arg0, %c0_i32, %c0_i32_0 : i32, i32, i32
  }
  func.func @transform_4(%arg0: i32) -> (i32, i32, i32, i32) {
    %c0_i32 = arith.constant 0 : i32
    %c0_i32_0 = arith.constant 0 : i32
    %c0_i32_1 = arith.constant 0 : i32
    %c0_i32_2 = arith.constant 0 : i32
    return %arg0, %c0_i32, %c0_i32_0, %c0_i32_1 : i32, i32, i32, i32
  }
  func.func @transform_5(%arg0: i32) -> (i32, i32, i32, i32) {
    %c0_i32 = arith.constant 0 : i32
    %c0_i32_0 = arith.constant 0 : i32
    %c0_i32_1 = arith.constant 0 : i32
    %c0_i32_2 = arith.constant 0 : i32
    return %arg0, %c0_i32, %c0_i32_0, %c0_i32_1 : i32, i32, i32, i32
  }
  func.func @transform_6(%arg0: i32) -> (i32, i32, i32, i32) {
    %c0_i32 = arith.constant 0 : i32
    %c0_i32_0 = arith.constant 0 : i32
    %c0_i32_1 = arith.constant 0 : i32
    %c0_i32_2 = arith.constant 0 : i32
    return %arg0, %c0_i32, %c0_i32_0, %c0_i32_1 : i32, i32, i32, i32
  }
}

</mosaic_0001>

<llo_original>
// kernel: tpu_custom_call.1
$region0: #{tpu_custom_call.1}
  #allocation0 [shape = 'u32[]', space=smem, size = 0x4, offset = 0x4, fixed_abs, tag = 'smem constant byte address 0x4 - core index']
  #allocation1 [shape = 'u32[144,128]{1,0:T(1,128)}', space=vmem, size = 0x12000, scoped, tag = 'internal scratch']
  %s0 = inlined_call_operand.hbm [shape: f32[2,8,32], index: 0, kind: input, shape index: {}]
  %s1 = inlined_call_operand.hbm [shape: f32[32,64], index: 1, kind: input, shape index: {}]
  %s2 = inlined_call_operand.hbm [shape: f32[2,8,8], index: 2, kind: input, shape index: {}]
  %s3 = inlined_call_operand.hbm [shape: f32[2,8,8], index: 3, kind: input, shape index: {}]
  %s4 = inlined_call_operand.hbm [shape: f32[2,4,8,8], index: 4, kind: output, shape index: {0}]
  %s5 = inlined_call_operand.hbm [shape: f32[2,2,8,8], index: 5, kind: output, shape index: {1}]
  %s6 = inlined_call_operand.hbm [shape: f32[2,2,8,8], index: 6, kind: output, shape index: {2}]
  %7 = xla_tuple %s4, %s5, %s6
  %s8 = sld [smem:[#allocation0]]
  $region81: #{tpu_custom_call.1} parent=0
    _
  %s10 = ssub.s32 1, %s8
  %s11 = scalar_select 0, %s10, %s8
  $region1: #{tpu_custom_call.1} parent=0
    #allocation2 [shape = 'u8[8192]{0}', space=vmem, size = 0x2000, scoped, tag = 'input window, operand 0']
    #allocation3 [shape = 's32[2]{0}', space=sflag, size = 0x8, scoped, tag = 'scoped memory for tpu_custom_call.1']
    #allocation4 [shape = 's32[2]{0}', space=sflag, size = 0x8, scoped, tag = 'scoped memory for tpu_custom_call.1']
    #allocation5 [shape = 'u8[16384]{0}', space=vmem, size = 0x4000, scoped, tag = 'input window, operand 1, single buffered']
    #allocation6 [shape = 's32[1]{0}', space=sflag, size = 0x4, scoped, tag = 'scoped memory for tpu_custom_call.1']
    #allocation7 [shape = 'u8[8192]{0}', space=vmem, size = 0x2000, scoped, tag = 'input window, operand 2']
    #allocation8 [shape = 'u8[8192]{0}', space=vmem, size = 0x2000, scoped, tag = 'input window, operand 3']
    #allocation9 [shape = 'u8[32768]{0}', space=vmem, size = 0x8000, scoped, tag = 'output window, operand 0']
    #allocation10 [shape = 'u8[16384]{0}', space=vmem, size = 0x4000, scoped, tag = 'output window, operand 1']
    #allocation11 [shape = 's32[2]{0}', space=sflag, size = 0x8, scoped, tag = 'scoped memory for tpu_custom_call.1']
    #allocation12 [shape = 'u8[16384]{0}', space=vmem, size = 0x4000, scoped, tag = 'output window, operand 2']
    %12 = vsyncpa [#allocation3], 0
    %s13 = scalar_lea.sflag [#allocation3], 1
    %14 = vsyncpa %s13, 0
    %15 = vsyncpa [#allocation6], 0
    %16 = vsyncpa [#allocation4], 0
    %s17 = scalar_lea.sflag [#allocation4], 1
    %18 = vsyncpa %s17, 0
    %19 = vsyncpa [#allocation11], 0
    %s20 = scalar_lea.sflag [#allocation11], 1
    %21 = vsyncpa %s20, 0
    loop: start=0, step=1, limit=4
    $region2: #{tpu_custom_call.1} parent=1 // loop_pre_header
      _
    $region3: #{tpu_custom_call.1} parent=1 // loop_header
      %s23 = sphi 0, %s27
      %p24 = scmp.ge.s32.totalorder %s23, 4
      %s33 = sphi 0, %s35
      %s36 = sphi 0, %s33
      %s37 = sphi 0, %s36
      %s53 = sphi 0, %s37
      %s57 = sphi 0, %s57
      %s59 = sphi 0, %s57
      %s60 = sphi 0, %s59
      %s74 = sphi 0, %s60
      %s80 = sphi 0, %s82
      %s83 = sphi 0, %s80
      %s84 = sphi 0, %s83
      %s100 = sphi 0, %s84
      %s106 = sphi 0, %s108
      %s109 = sphi 0, %s106
      %s110 = sphi 0, %s109
      %s126 = sphi 0, %s110
      %s132 = sphi 0, %s134
      %s135 = sphi 0, %s132
      %s136 = sphi 0, %s135
      %s152 = sphi 0, %s136
      %s158 = sphi 0, %s160
      %s161 = sphi 0, %s158
      %s162 = sphi 0, %s161
      %s178 = sphi 0, %s162
      %s184 = sphi 0, %s186
      %s187 = sphi 0, %s184
      %s188 = sphi 0, %s187
      %s204 = sphi 0, %s188
    $region4: #{tpu_custom_call.1} parent=1 // loop_header_branch
      %26 = sbr.rel (%p24) target = $region8
    $region5: #{tpu_custom_call.1} parent=1 // loop_body
      %s28 = ssub.s32 %s23, 1
      %s29 = ssub.s32 %s23, 2
      %s30 = sadd.s32 %s23, 1
      %s31 = ssub.s32 %s23, %s30
      %p32 = scmp.eq.s32.totalorder %s31, 0
      %s34 = sadd.s32 %s33, 1
      %s35 = scalar_select %p32, %s33, %s34
      %p38 = pneg %p32
      %p39 = scmp.eq.s32.totalorder %s23, 1
      %p40 = por %p38, %p39
      %p41 = scmp.ne.s32.totalorder %s33, %s36
      %p42 = scmp.eq.s32.totalorder %s23, 0
      %p43 = por %p41, %p42
      %p44 = scmp.ne.s32.totalorder %s33, %s36
      %p45 = scmp.eq.s32.totalorder %s28, 1
      %p46 = por %p44, %p45
      %p47 = scmp.ne.s32.totalorder %s36, %s37
      %p48 = scmp.eq.s32.totalorder %s28, 0
      %p49 = por %p47, %p48
      %p50 = scmp.ne.s32.totalorder %s36, %s37
      %p51 = scmp.eq.s32.totalorder %s29, 1
      %p52 = por %p50, %p51
      %p54 = scmp.ne.s32.totalorder %s37, %s53
      %p55 = scmp.eq.s32.totalorder %s29, 0
      %p56 = por %p54, %p55
      %s58 = sadd.s32 %s57, 1
      %p61 = scmp.eq.s32.totalorder %s23, 1
      %p62 = scmp.ne.s32.totalorder %s57, %s59
      %p63 = scmp.eq.s32.totalorder %s23, 0
      %p64 = por %p62, %p63
      %p65 = scmp.ne.s32.totalorder %s57, %s59
      %p66 = scmp.eq.s32.totalorder %s28, 1
      %p67 = por %p65, %p66
      %p68 = scmp.ne.s32.totalorder %s59, %s60
      %p69 = scmp.eq.s32.totalorder %s28, 0
      %p70 = por %p68, %p69
      %p71 = scmp.ne.s32.totalorder %s59, %s60
      %p72 = scmp.eq.s32.totalorder %s29, 1
      %p73 = por %p71, %p72
      %p75 = scmp.ne.s32.totalorder %s60, %s74
      %p76 = scmp.eq.s32.totalorder %s29, 0
      %p77 = por %p75, %p76
      %s78 = ssub.s32 %s23, %s30
      %p79 = scmp.eq.s32.totalorder %s78, 0
      %s81 = sadd.s32 %s80, 1
      %s82 = scalar_select %p79, %s80, %s81
      %p85 = pneg %p79
      %p86 = scmp.eq.s32.totalorder %s23, 1
      %p87 = por %p85, %p86
      %p88 = scmp.ne.s32.totalorder %s80, %s83
      %p89 = scmp.eq.s32.totalorder %s23, 0
      %p90 = por %p88, %p89
      %p91 = scmp.ne.s32.totalorder %s80, %s83
      %p92 = scmp.eq.s32.totalorder %s28, 1
      %p93 = por %p91, %p92
      %p94 = scmp.ne.s32.totalorder %s83, %s84
      %p95 = scmp.eq.s32.totalorder %s28, 0
      %p96 = por %p94, %p95
      %p97 = scmp.ne.s32.totalorder %s83, %s84
      %p98 = scmp.eq.s32.totalorder %s29, 1
      %p99 = por %p97, %p98
      %p101 = scmp.ne.s32.totalorder %s84, %s100
      %p102 = scmp.eq.s32.totalorder %s29, 0
      %p103 = por %p101, %p102
      %s104 = ssub.s32 %s23, %s30
      %p105 = scmp.eq.s32.totalorder %s104, 0
      %s107 = sadd.s32 %s106, 1
      %s108 = scalar_select %p105, %s106, %s107
      %p111 = pneg %p105
      %p112 = scmp.eq.s32.totalorder %s23, 1
      %p113 = por %p111, %p112
      %p114 = scmp.ne.s32.totalorder %s106, %s109
      %p115 = scmp.eq.s32.totalorder %s23, 0
      %p116 = por %p114, %p115
      %p117 = scmp.ne.s32.totalorder %s106, %s109
      %p118 = scmp.eq.s32.totalorder %s28, 1
      %p119 = por %p117, %p118
      %p120 = scmp.ne.s32.totalorder %s109, %s110
      %p121 = scmp.eq.s32.totalorder %s28, 0
      %p122 = por %p120, %p121
      %p123 = scmp.ne.s32.totalorder %s109, %s110
      %p124 = scmp.eq.s32.totalorder %s29, 1
      %p125 = por %p123, %p124
      %p127 = scmp.ne.s32.totalorder %s110, %s126
      %p128 = scmp.eq.s32.totalorder %s29, 0
      %p129 = por %p127, %p128
      %s130 = ssub.s32 %s23, %s30
      %p131 = scmp.eq.s32.totalorder %s130, 0
      %s133 = sadd.s32 %s132, 1
      %s134 = scalar_select %p131, %s132, %s133
      %p137 = pneg %p131
      %p138 = scmp.eq.s32.totalorder %s23, 1
      %p139 = por %p137, %p138
      %p140 = scmp.ne.s32.totalorder %s132, %s135
      %p141 = scmp.eq.s32.totalorder %s23, 0
      %p142 = por %p140, %p141
      %p143 = scmp.ne.s32.totalorder %s132, %s135
      %p144 = scmp.eq.s32.totalorder %s28, 1
      %p145 = por %p143, %p144
      %p146 = scmp.ne.s32.totalorder %s135, %s136
      %p147 = scmp.eq.s32.totalorder %s28, 0
      %p148 = por %p146, %p147
      %p149 = scmp.ne.s32.totalorder %s135, %s136
      %p150 = scmp.eq.s32.totalorder %s29, 1
      %p151 = por %p149, %p150
      %p153 = scmp.ne.s32.totalorder %s136, %s152
      %p154 = scmp.eq.s32.totalorder %s29, 0
      %p155 = por %p153, %p154
      %s156 = ssub.s32 %s23, %s30
      %p157 = scmp.eq.s32.totalorder %s156, 0
      %s159 = sadd.s32 %s158, 1
      %s160 = scalar_select %p157, %s158, %s159
      %p163 = pneg %p157
      %p164 = scmp.eq.s32.totalorder %s23, 1
      %p165 = por %p163, %p164
      %p166 = scmp.ne.s32.totalorder %s158, %s161
      %p167 = scmp.eq.s32.totalorder %s23, 0
      %p168 = por %p166, %p167
      %p169 = scmp.ne.s32.totalorder %s158, %s161
      %p170 = scmp.eq.s32.totalorder %s28, 1
      %p171 = por %p169, %p170
      %p172 = scmp.ne.s32.totalorder %s161, %s162
      %p173 = scmp.eq.s32.totalorder %s28, 0
      %p174 = por %p172, %p173
      %p175 = scmp.ne.s32.totalorder %s161, %s162
      %p176 = scmp.eq.s32.totalorder %s29, 1
      %p177 = por %p175, %p176
      %p179 = scmp.ne.s32.totalorder %s162, %s178
      %p180 = scmp.eq.s32.totalorder %s29, 0
      %p181 = por %p179, %p180
      %s182 = ssub.s32 %s23, %s30
      %p183 = scmp.eq.s32.totalorder %s182, 0
      %s185 = sadd.s32 %s184, 1
      %s186 = scalar_select %p183, %s184, %s185
      %p189 = pneg %p183
      %p190 = scmp.eq.s32.totalorder %s23, 1
      %p191 = por %p189, %p190
      %p192 = scmp.ne.s32.totalorder %s184, %s187
      %p193 = scmp.eq.s32.totalorder %s23, 0
      %p194 = por %p192, %p193
      %p195 = scmp.ne.s32.totalorder %s184, %s187
      %p196 = scmp.eq.s32.totalorder %s28, 1
      %p197 = por %p195, %p196
      %p198 = scmp.ne.s32.totalorder %s187, %s188
      %p199 = scmp.eq.s32.totalorder %s28, 0
      %p200 = por %p198, %p199
      %p201 = scmp.ne.s32.totalorder %s187, %s188
      %p202 = scmp.eq.s32.totalorder %s29, 1
      %p203 = por %p201, %p202
      %p205 = scmp.ne.s32.totalorder %s188, %s204
      %p206 = scmp.eq.s32.totalorder %s29, 0
      %p207 = por %p205, %p206
      %p208 = scmp.le.s32.totalorder 1, %s23
      %p209 = scmp.lt.s32.totalorder %s23, 3
      %p210 = pnand %p208, %p209
      %p211 = pneg %p210
      // Predicated region
      $region9: #{tpu_custom_call.1} parent=5 // pred_check
        _
      $region10: #{tpu_custom_call.1} parent=5 // pred_check_branch
        %213 = sbr.rel (%p210) target = $region12
      $region11: #{tpu_custom_call.1} parent=5 // pred_region
        %s214 = ssub.s32 %s23, 1
        // Predicated region
        $region13: #{tpu_custom_call.1} parent=11 // pred_check
          %p215 = pneg %p70
        $region14: #{tpu_custom_call.1} parent=11 // pred_check_branch
          %217 = sbr.rel (%p215) target = $region16
        $region15: #{tpu_custom_call.1} parent=11 // pred_region
          %s219 = ssub.s32 512, 512
          %220 = vsyncadd [#allocation6], %s219
          %s221 = sshll.u32 [#allocation5], 4
          %s222 = int_to_ptr.vmem [resolvable:$true] %s221
          %227 = dma.hbm_to_vmem [thread:$0]  %s1, 512, %s222, [#allocation6], 128, 128, 8
        $region16: #{tpu_custom_call.1} parent=11 // pred_fallthru
          _
      $region12: #{tpu_custom_call.1} parent=5 // pred_fallthru
        _
      %p228 = scmp.lt.s32.totalorder %s23, 2
      // Predicated region
      $region17: #{tpu_custom_call.1} parent=5 // pred_check
        %p229 = pneg %p228
      $region18: #{tpu_custom_call.1} parent=5 // pred_check_branch
        %231 = sbr.rel (%p229) target = $region20
      $region19: #{tpu_custom_call.1} parent=5 // pred_region
        // Predicated region
        $region21: #{tpu_custom_call.1} parent=19 // pred_check
          %p232 = pneg %p43
        $region22: #{tpu_custom_call.1} parent=19 // pred_check_branch
          %234 = sbr.rel (%p232) target = $region24
        $region23: #{tpu_custom_call.1} parent=19 // pred_region
          %s235 = sand.u32 %s23, 1
          %s236 = scalar_lea.sflag [#allocation3], %s235
          %s237 = sand.u32 %s33, 1
          %s238 = smul.addr %s237, 8
          %s239 = scalar_lea.vmem [#allocation2], %s238
          %s241 = ssub.s32 128, 128
          %242 = vsyncadd %s236, %s241
          %s243 = smul.addr %s23, 128
          %s244 = scalar_lea.hbm %s0, %s243
          %s246 = sshll.u32 %s239, 4
          %s247 = int_to_ptr.vmem [resolvable:$true] %s246
          %249 = dma.hbm_to_vmem [thread:$0]  %s244, 128, %s247, %s236
        $region24: #{tpu_custom_call.1} parent=19 // pred_fallthru
          _
        // Predicated region
        $region25: #{tpu_custom_call.1} parent=19 // pred_check
          %p250 = pneg %p90
        $region26: #{tpu_custom_call.1} parent=19 // pred_check_branch
          %252 = sbr.rel (%p250) target = $region28
        $region27: #{tpu_custom_call.1} parent=19 // pred_region
          %s253 = sand.u32 %s23, 1
          %s254 = scalar_lea.sflag [#allocation3], %s253
          %s255 = sand.u32 %s80, 1
          %s256 = smul.addr %s255, 8
          %s257 = scalar_lea.vmem [#allocation7], %s256
          %s259 = ssub.s32 128, 128
          %260 = vsyncadd %s254, %s259
          %s261 = smul.addr %s23, 128
          %s262 = scalar_lea.hbm %s2, %s261
          %s264 = sshll.u32 %s257, 4
          %s265 = int_to_ptr.vmem [resolvable:$true] %s264
          %267 = dma.hbm_to_vmem [thread:$0]  %s262, 128, %s265, %s254
        $region28: #{tpu_custom_call.1} parent=19 // pred_fallthru
          _
        // Predicated region
        $region29: #{tpu_custom_call.1} parent=19 // pred_check
          %p268 = pneg %p116
        $region30: #{tpu_custom_call.1} parent=19 // pred_check_branch
          %270 = sbr.rel (%p268) target = $region32
        $region31: #{tpu_custom_call.1} parent=19 // pred_region
          %s271 = sand.u32 %s23, 1
          %s272 = scalar_lea.sflag [#allocation3], %s271
          %s273 = sand.u32 %s106, 1
          %s274 = smul.addr %s273, 8
          %s275 = scalar_lea.vmem [#allocation8], %s274
          %s277 = ssub.s32 128, 128
          %278 = vsyncadd %s272, %s277
          %s279 = smul.addr %s23, 128
          %s280 = scalar_lea.hbm %s3, %s279
          %s282 = sshll.u32 %s275, 4
          %s283 = int_to_ptr.vmem [resolvable:$true] %s282
          %285 = dma.hbm_to_vmem [thread:$0]  %s280, 128, %s283, %s272
        $region32: #{tpu_custom_call.1} parent=19 // pred_fallthru
          _
      $region20: #{tpu_custom_call.1} parent=5 // pred_fallthru
        _
      %p286 = scmp.le.s32.totalorder 1, %s23
      %p287 = scmp.lt.s32.totalorder %s23, 3
      %p288 = pnand %p286, %p287
      %p289 = pneg %p288
      // Predicated region
      $region33: #{tpu_custom_call.1} parent=5 // pred_check
        _
      $region34: #{tpu_custom_call.1} parent=5 // pred_check_branch
        %291 = sbr.rel (%p288) target = $region36
      $region35: #{tpu_custom_call.1} parent=5 // pred_region
        %s292 = ssub.s32 %s23, 1
        %s293 = sand.u32 %s28, 1
        %s294 = scalar_lea.sflag [#allocation3], %s293
        %s295 = sand.u32 %s36, 1
        %s296 = smul.addr %s295, 8
        %s297 = scalar_lea.vmem [#allocation2], %s296
        // Predicated region
        $region37: #{tpu_custom_call.1} parent=35 // pred_check
          %p298 = pneg %p49
        $region38: #{tpu_custom_call.1} parent=35 // pred_check_branch
          %300 = sbr.rel (%p298) target = $region40
        $region39: #{tpu_custom_call.1} parent=35 // pred_region
          %301 = dma.done %s294, 128
        $region40: #{tpu_custom_call.1} parent=35 // pred_fallthru
          _
        // Predicated region
        $region41: #{tpu_custom_call.1} parent=35 // pred_check
          %p302 = pneg %p70
        $region42: #{tpu_custom_call.1} parent=35 // pred_check_branch
          %304 = sbr.rel (%p302) target = $region44
        $region43: #{tpu_custom_call.1} parent=35 // pred_region
          %305 = dma.done [#allocation6], 512
        $region44: #{tpu_custom_call.1} parent=35 // pred_fallthru
          _
        %s306 = sand.u32 %s28, 1
        %s307 = scalar_lea.sflag [#allocation3], %s306
        %s308 = sand.u32 %s83, 1
        %s309 = smul.addr %s308, 8
        %s310 = scalar_lea.vmem [#allocation7], %s309
        // Predicated region
        $region45: #{tpu_custom_call.1} parent=35 // pred_check
          %p311 = pneg %p96
        $region46: #{tpu_custom_call.1} parent=35 // pred_check_branch
          %313 = sbr.rel (%p311) target = $region48
        $region47: #{tpu_custom_call.1} parent=35 // pred_region
          %314 = dma.done %s307, 128
        $region48: #{tpu_custom_call.1} parent=35 // pred_fallthru
          _
        %s315 = sand.u32 %s28, 1
        %s316 = scalar_lea.sflag [#allocation3], %s315
        %s317 = sand.u32 %s109, 1
        %s318 = smul.addr %s317, 8
        %s319 = scalar_lea.vmem [#allocation8], %s318
        // Predicated region
        $region49: #{tpu_custom_call.1} parent=35 // pred_check
          %p320 = pneg %p122
        $region50: #{tpu_custom_call.1} parent=35 // pred_check_branch
          %322 = sbr.rel (%p320) target = $region52
        $region51: #{tpu_custom_call.1} parent=35 // pred_region
          %323 = dma.done %s316, 128
        $region52: #{tpu_custom_call.1} parent=35 // pred_fallthru
          _
        %s324 = sand.u32 %s28, 1
        %s325 = scalar_lea.sflag [#allocation3], %s324
        %s326 = sand.u32 %s36, 1
        %s327 = smul.addr %s326, 8
        %s328 = scalar_lea.vmem [#allocation2], %s327
        %p329 = pneg %p49
        %p330 = pneg %p46
        %p331 = pneg %p70
        %p332 = pneg %p67
        %s333 = sand.u32 %s28, 1
        %s334 = scalar_lea.sflag [#allocation3], %s333
        %s335 = sand.u32 %s83, 1
        %s336 = smul.addr %s335, 8
        %s337 = scalar_lea.vmem [#allocation7], %s336
        %p338 = pneg %p96
        %p339 = pneg %p93
        %s340 = sand.u32 %s28, 1
        %s341 = scalar_lea.sflag [#allocation3], %s340
        %s342 = sand.u32 %s109, 1
        %s343 = smul.addr %s342, 8
        %s344 = scalar_lea.vmem [#allocation8], %s343
        %p345 = pneg %p122
        %p346 = pneg %p119
        %p347 = pneg %p148
        %p348 = pneg %p145
        %s349 = sand.u32 %s135, 1
        %s350 = scalar_lea.sflag [#allocation4], %s349
        %s351 = sand.u32 %s135, 1
        %s352 = smul.addr %s351, 32
        %s353 = scalar_lea.vmem [#allocation9], %s352
        %p354 = pneg %p174
        %p355 = pneg %p171
        %s356 = sand.u32 %s28, 1
        %s357 = scalar_lea.sflag [#allocation11], %s356
        %s358 = sand.u32 %s161, 1
        %s359 = smul.addr %s358, 16
        %s360 = scalar_lea.vmem [#allocation10], %s359
        %p361 = pneg %p200
        %p362 = pneg %p197
        %s363 = sand.u32 %s28, 1
        %s364 = scalar_lea.sflag [#allocation11], %s363
        %s365 = sand.u32 %s187, 1
        %s366 = smul.addr %s365, 16
        %s367 = scalar_lea.vmem [#allocation12], %s366
        %v368 = vld [vmem:[%s297] sm:$0xff]
        %v369 = vld [vmem:[#allocation5] sm:$0xff]
        %v370 = vld [vmem:[#allocation5 + $0x8] sm:$0xff]
        %v371 = vld [vmem:[#allocation5 + $0x10] sm:$0xff]
        %v372 = vld [vmem:[#allocation5 + $0x18] sm:$0xff]
        %vm373 = vcmask 261120
        %v375 = vsel %vm373, %v368, 0
        %377 = vmatprep.subr.mxu0 0.0
        %378 = vmatpush1.msra.mxu0 %v369
        %379 = vmatprep.subr.mxu0 0.0
        %380 = vmatpush1.msra.mxu0 %v370
        %381 = vmatprep.subr.mxu0 0.0
        %382 = vmatpush1.msra.mxu0 %v371
        %383 = vmatprep.subr.mxu0 0.0
        %384 = vmatpush1.msra.mxu0 %v372
        %385 = vmatprep.subr.mxu0 0.0
        %386 = vmatpush1.msra.mxu0 0.0
        %387 = vmatprep.subr.mxu0 0.0
        %388 = vmatpush1.msra.mxu0 0.0
        %389 = vmatprep.subr.mxu0 0.0
        %390 = vmatpush1.msra.mxu0 0.0
        %391 = vmatprep.subr.mxu0 0.0
        %392 = vmatpush1.msra.mxu0 0.0
        %393 = vmatprep.subr.mxu0 0.0
        %394 = vmatpush1.msra.mxu0 0.0
        %395 = vmatprep.subr.mxu0 0.0
        %396 = vmatpush1.msra.mxu0 0.0
        %397 = vmatprep.subr.mxu0 0.0
        %398 = vmatpush1.msra.mxu0 0.0
        %399 = vmatprep.subr.mxu0 0.0
        %400 = vmatpush1.msra.mxu0 0.0
        %401 = vmatprep.subr.mxu0 0.0
        %402 = vmatpush1.msra.mxu0 0.0
        %403 = vmatprep.subr.mxu0 0.0
        %404 = vmatpush1.msra.mxu0 0.0
        %405 = vmatprep.subr.mxu0 0.0
        %406 = vmatpush1.msra.mxu0 0.0
        %407 = vmatprep.subr.mxu0 0.0
        %408 = vmatpush1.msra.mxu0 0.0
        %409 = vmatprep.subr.mxu0 0.0
        %410 = vmatpush1.msra.mxu0 0.0
        %411 = vmatprep.subr.mxu0 0.0
        %412 = vmatpush1.msra.mxu0 0.0
        %413 = vmatprep.subr.mxu0 0.0
        %414 = vmatpush1.msra.mxu0 0.0
        %415 = vmatprep.subr.mxu0 0.0
        %416 = vmatpush1.msra.mxu0 0.0
        %417 = vmatprep.subr.mxu0 0.0
        %418 = vmatpush1.msra.mxu0 0.0
        %419 = vmatprep.subr.mxu0 0.0
        %420 = vmatpush1.msra.mxu0 0.0
        %421 = vmatprep.subr.mxu0 0.0
        %422 = vmatpush1.msra.mxu0 0.0
        %423 = vmatprep.subr.mxu0 0.0
        %424 = vmatpush1.msra.mxu0 0.0
        %425 = vmatprep.subr.mxu0 0.0
        %426 = vmatpush1.msra.mxu0 0.0
        %427 = vmatprep.subr.mxu0 0.0
        %428 = vmatpush1.msra.mxu0 0.0
        %429 = vmatprep.subr.mxu0 0.0
        %430 = vmatpush1.msra.mxu0 0.0
        %431 = vmatprep.subr.mxu0 0.0
        %432 = vmatpush1.msra.mxu0 0.0
        %433 = vmatprep.subr.mxu0 0.0
        %434 = vmatpush1.msra.mxu0 0.0
        %435 = vmatprep.subr.mxu0 0.0
        %436 = vmatpush1.msra.mxu0 0.0
        %437 = vmatprep.subr.mxu0 0.0
        %438 = vmatpush1.msra.mxu0 0.0
        %439 = vmatprep.subr.mxu0 0.0
        %440 = vmatpush1.msra.mxu0 0.0
        %441 = vmatprep.mubr.f32.mxu0 0.0
        %442 = vmatmul.mubr.f32.gmra.mrb[0].mxu0 %v375
        %v443 = vpop.f32.mrb[0].mxu0
        %v444 = vadd.f32 0.0, %v443
        %v445 = vpop.f32.mrb[0].mxu0
        %446 = vdwg.mxu0
        %v447 = vld [vmem:[%s310] sm:$0xff]
        %v448 = vld [vmem:[%s319] sm:$0xff]
        %450 = vrot.lane.b32.xlu0 %v444, 124
        %v451 = vpop.permute.xlu0 %450
        %453 = vrot.lane.b32.xlu0 %v444, 4
        %v454 = vpop.permute.xlu0 %453
        %vm456 = vcmask 31744
        %v457 = vsel %vm456, %v451, %v454
        %v458 = vmul.f32 %v444, %v447
        %v459 = vmul.f32 %v457, %v448
        %v460 = vadd.f32 %v458, %v459
        %vm461 = vcmask 64512
        %462 = vst.msk [vmem:[%s353] sm:$0xff] %vm461, %v460
        %463 = vrot.lane.b32.xlu0 %v444, 116
        %v464 = vpop.permute.xlu0 %463
        %v466 = vsel %vm456, %v464, %v451
        %468 = vrot.lane.b32.xlu0 %v447, 8
        %v469 = vpop.permute.xlu0 %468
        %v471 = vmul.f32 %v444, %v469
        %v472 = vmul.f32 %v466, %v448
        %474 = vrot.lane.b32.xlu0 %v472, 8
        %v475 = vpop.permute.xlu0 %474
        %v477 = vadd.f32 %v471, %v475
        %479 = vrot.lane.b32.xlu0 %v477, 120
        %v480 = vpop.permute.xlu0 %479
        %s482 = scalar_lea.vmem %s353, 8 [#allocation9]
        %483 = vst.msk [vmem:[%s482] sm:$0xff] %vm461, %v480
        %484 = vrot.lane.b32.xlu0 %v444, 108
        %v485 = vpop.permute.xlu0 %484
        %v487 = vsel %vm456, %v485, %v464
        %488 = vrot.lane.b32.xlu0 %v447, 16
        %v489 = vpop.permute.xlu0 %488
        %v491 = vmul.f32 %v444, %v489
        %v492 = vmul.f32 %v487, %v448
        %494 = vrot.lane.b32.xlu0 %v492, 16
        %v495 = vpop.permute.xlu0 %494
        %v497 = vadd.f32 %v491, %v495
        %499 = vrot.lane.b32.xlu0 %v497, 112
        %v500 = vpop.permute.xlu0 %499
        %s502 = scalar_lea.vmem %s353, 16 [#allocation9]
        %503 = vst.msk [vmem:[%s502] sm:$0xff] %vm461, %v500
        %504 = vrot.lane.b32.xlu0 %v444, 100
        %v505 = vpop.permute.xlu0 %504
        %v507 = vsel %vm456, %v505, %v485
        %508 = vrot.lane.b32.xlu0 %v447, 24
        %v509 = vpop.permute.xlu0 %508
        %v511 = vmul.f32 %v444, %v509
        %v512 = vmul.f32 %v507, %v448
        %514 = vrot.lane.b32.xlu0 %v512, 24
        %v515 = vpop.permute.xlu0 %514
        %v517 = vadd.f32 %v511, %v515
        %519 = vrot.lane.b32.xlu0 %v517, 104
        %v520 = vpop.permute.xlu0 %519
        %s522 = scalar_lea.vmem %s353, 24 [#allocation9]
        %523 = vst.msk [vmem:[%s522] sm:$0xff] %vm461, %v520
        %524 = vrot.lane.b32.xlu0 %v444, 92
        %v525 = vpop.permute.xlu0 %524
        %v527 = vsel %vm456, %v525, %v505
        %528 = vrot.lane.b32.xlu0 %v447, 32
        %v529 = vpop.permute.xlu0 %528
        %v531 = vmul.f32 %v444, %v529
        %v532 = vmul.f32 %v527, %v448
        %534 = vrot.lane.b32.xlu0 %v532, 32
        %v535 = vpop.permute.xlu0 %534
        %v537 = vadd.f32 %v531, %v535
        %539 = vrot.lane.b32.xlu0 %v537, 96
        %v540 = vpop.permute.xlu0 %539
        %542 = vst.msk [vmem:[%s360] sm:$0xff] %vm461, %v540
        %543 = vrot.lane.b32.xlu0 %v444, 80
        %v544 = vpop.permute.xlu0 %543
        %546 = vst.msk [vmem:[%s367] sm:$0xff] %vm461, %v544
        %547 = vrot.lane.b32.xlu0 %v444, 84
        %v548 = vpop.permute.xlu0 %547
        %v550 = vsel %vm456, %v548, %v525
        %551 = vrot.lane.b32.xlu0 %v447, 40
        %v552 = vpop.permute.xlu0 %551
        %v554 = vmul.f32 %v444, %v552
        %v555 = vmul.f32 %v550, %v448
        %557 = vrot.lane.b32.xlu0 %v555, 40
        %v558 = vpop.permute.xlu0 %557
        %v560 = vadd.f32 %v554, %v558
        %562 = vrot.lane.b32.xlu0 %v560, 88
        %v563 = vpop.permute.xlu0 %562
        %s565 = scalar_lea.vmem %s360, 8 [#allocation10]
        %566 = vst.msk [vmem:[%s565] sm:$0xff] %vm461, %v563
        %567 = vrot.lane.b32.xlu0 %v444, 72
        %v568 = vpop.permute.xlu0 %567
        %s570 = scalar_lea.vmem %s367, 8 [#allocation12]
        %571 = vst.msk [vmem:[%s570] sm:$0xff] %vm461, %v568
        %s572 = sand.u32 %s135, 1
        %s573 = scalar_lea.sflag [#allocation4], %s572
        %s574 = sand.u32 %s135, 1
        %s575 = smul.addr %s574, 32
        %s576 = scalar_lea.vmem [#allocation9], %s575
        %s577 = sand.u32 %s28, 1
        %s578 = scalar_lea.sflag [#allocation11], %s577
        %s579 = sand.u32 %s161, 1
        %s580 = smul.addr %s579, 16
        %s581 = scalar_lea.vmem [#allocation10], %s580
        %s582 = sand.u32 %s28, 1
        %s583 = scalar_lea.sflag [#allocation11], %s582
        %s584 = sand.u32 %s187, 1
        %s585 = smul.addr %s584, 16
        %s586 = scalar_lea.vmem [#allocation12], %s585
        // Predicated region
        $region53: #{tpu_custom_call.1} parent=35 // pred_check
          %p587 = pneg %p145
        $region54: #{tpu_custom_call.1} parent=35 // pred_check_branch
          %589 = sbr.rel (%p587) target = $region56
        $region55: #{tpu_custom_call.1} parent=35 // pred_region
          %s591 = ssub.s32 512, 512
          %592 = vsyncadd %s573, %s591
          %s593 = smul.addr %s28, 4
          %s594 = smul.addr %s593, 128
          %s595 = scalar_lea.hbm %s4, %s594
          %s596 = sshll.u32 %s576, 4
          %s597 = int_to_ptr.vmem [resolvable:$true] %s596
          %602 = dma.vmem_to_hbm [thread:$0]  %s597, 512, %s595, %s573, 128, 128, 8
        $region56: #{tpu_custom_call.1} parent=35 // pred_fallthru
          _
        // Predicated region
        $region57: #{tpu_custom_call.1} parent=35 // pred_check
          %p603 = pneg %p171
        $region58: #{tpu_custom_call.1} parent=35 // pred_check_branch
          %605 = sbr.rel (%p603) target = $region60
        $region59: #{tpu_custom_call.1} parent=35 // pred_region
          %s607 = ssub.s32 256, 256
          %608 = vsyncadd %s578, %s607
          %s609 = smul.addr %s28, 2
          %s610 = smul.addr %s609, 128
          %s611 = scalar_lea.hbm %s5, %s610
          %s612 = sshll.u32 %s581, 4
          %s613 = int_to_ptr.vmem [resolvable:$true] %s612
          %618 = dma.vmem_to_hbm [thread:$0]  %s613, 256, %s611, %s578, 128, 128, 8
        $region60: #{tpu_custom_call.1} parent=35 // pred_fallthru
          _
        // Predicated region
        $region61: #{tpu_custom_call.1} parent=35 // pred_check
          %p619 = pneg %p197
        $region62: #{tpu_custom_call.1} parent=35 // pred_check_branch
          %621 = sbr.rel (%p619) target = $region64
        $region63: #{tpu_custom_call.1} parent=35 // pred_region
          %s623 = ssub.s32 256, 256
          %624 = vsyncadd %s583, %s623
          %s625 = smul.addr %s28, 2
          %s626 = smul.addr %s625, 128
          %s627 = scalar_lea.hbm %s6, %s626
          %s628 = sshll.u32 %s586, 4
          %s629 = int_to_ptr.vmem [resolvable:$true] %s628
          %634 = dma.vmem_to_hbm [thread:$0]  %s629, 256, %s627, %s583, 128, 128, 8
        $region64: #{tpu_custom_call.1} parent=35 // pred_fallthru
          _
      $region36: #{tpu_custom_call.1} parent=5 // pred_fallthru
        _
      %p635 = scmp.le.s32.totalorder 2, %s23
      // Predicated region
      $region65: #{tpu_custom_call.1} parent=5 // pred_check
        %p636 = pneg %p635
      $region66: #{tpu_custom_call.1} parent=5 // pred_check_branch
        %638 = sbr.rel (%p636) target = $region68
      $region67: #{tpu_custom_call.1} parent=5 // pred_region
        %s639 = ssub.s32 %s23, 2
        // Predicated region
        $region69: #{tpu_custom_call.1} parent=67 // pred_check
          %p640 = pneg %p151
        $region70: #{tpu_custom_call.1} parent=67 // pred_check_branch
          %642 = sbr.rel (%p640) target = $region72
        $region71: #{tpu_custom_call.1} parent=67 // pred_region
          %s643 = sand.u32 %s136, 1
          %s644 = scalar_lea.sflag [#allocation4], %s643
          %s645 = sand.u32 %s136, 1
          %s646 = smul.addr %s645, 32
          %s647 = scalar_lea.vmem [#allocation9], %s646
          %648 = dma.done %s644, 512
        $region72: #{tpu_custom_call.1} parent=67 // pred_fallthru
          _
        // Predicated region
        $region73: #{tpu_custom_call.1} parent=67 // pred_check
          %p649 = pneg %p177
        $region74: #{tpu_custom_call.1} parent=67 // pred_check_branch
          %651 = sbr.rel (%p649) target = $region76
        $region75: #{tpu_custom_call.1} parent=67 // pred_region
          %s652 = sand.u32 %s29, 1
          %s653 = scalar_lea.sflag [#allocation11], %s652
          %s654 = sand.u32 %s162, 1
          %s655 = smul.addr %s654, 16
          %s656 = scalar_lea.vmem [#allocation10], %s655
          %657 = dma.done %s653, 256
        $region76: #{tpu_custom_call.1} parent=67 // pred_fallthru
          _
        // Predicated region
        $region77: #{tpu_custom_call.1} parent=67 // pred_check
          %p658 = pneg %p203
        $region78: #{tpu_custom_call.1} parent=67 // pred_check_branch
          %660 = sbr.rel (%p658) target = $region80
        $region79: #{tpu_custom_call.1} parent=67 // pred_region
          %s661 = sand.u32 %s29, 1
          %s662 = scalar_lea.sflag [#allocation11], %s661
          %s663 = sand.u32 %s188, 1
          %s664 = smul.addr %s663, 16
          %s665 = scalar_lea.vmem [#allocation12], %s664
          %666 = dma.done %s662, 256
        $region80: #{tpu_custom_call.1} parent=67 // pred_fallthru
          _
      $region68: #{tpu_custom_call.1} parent=5 // pred_fallthru
        _
    $region6: #{tpu_custom_call.1} parent=1 // loop_footer
      %s27 = sadd.s32 1, %s23
    $region7: #{tpu_custom_call.1} parent=1 // loop_footer_branch
      %22 = sbr.rel target = $region3
    $region8: #{tpu_custom_call.1} parent=1 // loop_exit
      _
    %667 = vsyncpa [#allocation3], 1
    %s668 = scalar_lea.sflag [#allocation3], 1
    %669 = vsyncpa %s668, 1
    %670 = vsyncpa [#allocation6], 1
    %671 = vsyncpa [#allocation4], 1
    %s672 = scalar_lea.sflag [#allocation4], 1
    %673 = vsyncpa %s672, 1
    %674 = vsyncpa [#allocation11], 1
    %s675 = scalar_lea.sflag [#allocation11], 1
    %676 = vsyncpa %s675, 1

</llo_original>
